<compile_context>
chip_gen: v6e
topology: v6e:2x2x1
jax: 0.10.0
libtpu: 0.0.40
codegen_flags: <defaults>
</compile_context>

<pallas_src>
import jax
import jax.numpy as jnp
from jax.experimental import pallas as pl
from jax.experimental.pallas import tpu as pltpu

_LANE = 128


def _round_up(x: int, m: int) -> int:
    return ((x + m - 1) // m) * m


def _conv1d_subsampling_kernel(x_ref, w1_ref, b1_ref, w2_ref, b2_ref, out_ref,
                               xt_ref, h_ref):
    # x_ref : (NB, C_in, L)      batch block, native NCL (lane-dense on L)
    # w1_ref: (3*C_in, C_out)    im2col-flattened conv1 weights
    # b1_ref: (1, C_out)         f32
    # w2_ref: (3*C_out, C_out)   im2col-flattened conv2 weights
    # b2_ref: (1, C_out)         f32
    # out_ref: (NB, C_out, L2)   native NCL output (lane-dense on L2)
    # xt_ref : VMEM scratch (NB*L,  C_in)   time-major copies of the inputs
    # h_ref  : VMEM scratch (NB*L1, C_out)  time-major conv1 activations
    NB, _, L = x_ref.shape
    L2 = out_ref.shape[2]
    L1 = h_ref.shape[0] // NB

    # Time-major layout (channels on lanes) so each conv layer is one MXU matmul.
    for b in range(NB):
        xt_ref[pl.ds(b * L, L), :] = x_ref[b].T

    # --- conv1: per-batch strided-slice im2col (stride 2, taps k=0..2), stacked along
    #     M across the batch block and fused into a single matmul ---
    cols1 = jnp.concatenate([
        jnp.concatenate(
            [xt_ref[pl.ds(b * L + k, L1, stride=2), :] for k in range(3)], axis=1)
        for b in range(NB)], axis=0)                       # (NB*L1, 3*C_in)
    h = jnp.dot(cols1, w1_ref[...], preferred_element_type=jnp.float32)
    h = h + b1_ref[...]
    h_ref[...] = h.astype(h_ref.dtype)

    # --- conv2: same trick on the intermediate activations ---
    cols2 = jnp.concatenate([
        jnp.concatenate(
            [h_ref[pl.ds(b * L1 + k, L2, stride=2), :] for k in range(3)], axis=1)
        for b in range(NB)], axis=0)                       # (NB*L2, 3*C_out)
    y = jnp.dot(cols2, w2_ref[...], preferred_element_type=jnp.float32)
    y = y + b2_ref[...]

    # Cast first (half the transpose bytes for bf16), then store channel-major NCL.
    y = y.astype(out_ref.dtype)                            # (NB*L2, C_out)
    for b in range(NB):
        out_ref[b] = y[b * L2:(b + 1) * L2, :].T           # (C_out, L2)


def conv1d_subsampling(x_ncl, w1, b1, w2, b2, *, batch_block=8, lane_align=True):
    """Conv1dSubampling forward.

    x_ncl: (N, C_in, L) — PyTorch NCL layout.
    w1: (C_out, C_in, 3),  b1: (C_out,)   first Conv1d  (k=3, s=2, no pad)
    w2: (C_out, C_out, 3), b2: (C_out,)   second Conv1d (k=3, s=2, no pad)
    returns (N, C_out, L2)
    """
    N, C_in, L = x_ncl.shape
    C_out = w1.shape[0]
    L1 = (L - 3) // 2 + 1
    L2 = (L1 - 3) // 2 + 1
    assert L1 > 0 and L2 > 0, "input length too short for two stride-2, k=3 convs"

    dt = x_ncl.dtype

    # --- lane-align channel counts so the 3 im2col taps start on 128-lane boundaries ---
    if lane_align:
        C_in_p = _round_up(C_in, _LANE)
        C_out_p = _round_up(C_out, _LANE)
    else:
        C_in_p, C_out_p = C_in, C_out

    if C_in_p != C_in:
        x_ncl = jnp.pad(x_ncl, ((0, 0), (0, C_in_p - C_in), (0, 0)))

    # im2col-flattened (and zero-padded) weights: w_flat[k*Cp + c, co] = w[co, c, k]
    w1_p = jnp.pad(w1, ((0, C_out_p - C_out), (0, C_in_p - C_in), (0, 0)))
    w2_p = jnp.pad(w2, ((0, C_out_p - C_out), (0, C_out_p - C_out), (0, 0)))
    w1_f = jnp.transpose(w1_p, (2, 1, 0)).reshape(3 * C_in_p, C_out_p).astype(dt)
    w2_f = jnp.transpose(w2_p, (2, 1, 0)).reshape(3 * C_out_p, C_out_p).astype(dt)
    b1_2d = jnp.pad(b1, (0, C_out_p - C_out)).reshape(1, C_out_p).astype(jnp.float32)
    b2_2d = jnp.pad(b2, (0, C_out_p - C_out)).reshape(1, C_out_p).astype(jnp.float32)

    # --- batch blocking: >= 2 grid steps whenever N > 1 (v7x megacore balance) ---
    if N == 1:
        nb = 1
    else:
        g = max(2, pl.cdiv(N, batch_block))
        nb = pl.cdiv(N, g)
    N_pad = pl.cdiv(N, nb) * nb
    if N_pad != N:
        x_ncl = jnp.pad(x_ncl, ((0, N_pad - N), (0, 0), (0, 0)))
    grid = (N_pad // nb,)

    # --- explicit scoped-VMEM budget (default scoped limit is far below physical) ---
    bpe = jnp.dtype(dt).itemsize
    in_block = nb * C_in_p * L * bpe
    out_block = nb * C_out_p * L2 * bpe
    weights = (3 * C_in_p * C_out_p + 3 * C_out_p * C_out_p) * bpe + 2 * C_out_p * 4
    scratch = (nb * L * C_in_p + nb * L1 * C_out_p) * bpe
    temps = (nb * L1 * 3 * C_in_p) * bpe + (nb * L1 * C_out_p) * 4 \
        + (nb * L2 * 3 * C_out_p) * bpe + (nb * L2 * C_out_p) * 4
    est = 2 * (in_block + out_block) + 2 * weights + scratch + temps
    try:
        phys_vmem = pltpu.get_tpu_info().vmem_capacity_bytes
    except Exception:
        phys_vmem = 64 * 2**20  # conservative (v7x per-TC)
    vmem_limit = int(min(max(est * 3 // 2, 32 * 2**20), phys_vmem * 3 // 4))

    out = pl.pallas_call(
        _conv1d_subsampling_kernel,
        out_shape=jax.ShapeDtypeStruct((N_pad, C_out_p, L2), dt),
        grid_spec=pltpu.PrefetchScalarGridSpec(
            num_scalar_prefetch=0,
            grid=grid,
            in_specs=[
                pl.BlockSpec((nb, C_in_p, L), lambda n: (n, 0, 0)),     # batch block, NCL
                pl.BlockSpec((3 * C_in_p, C_out_p), lambda n: (0, 0)),  # grid-invariant weights
                pl.BlockSpec((1, C_out_p), lambda n: (0, 0)),
                pl.BlockSpec((3 * C_out_p, C_out_p), lambda n: (0, 0)),
                pl.BlockSpec((1, C_out_p), lambda n: (0, 0)),
            ],
            out_specs=pl.BlockSpec((nb, C_out_p, L2), lambda n: (n, 0, 0)),
            scratch_shapes=[
                pltpu.VMEM((nb * L, C_in_p), dt),     # time-major inputs
                pltpu.VMEM((nb * L1, C_out_p), dt),   # time-major conv1 activations
            ],
        ),
        compiler_params=pltpu.CompilerParams(
            dimension_semantics=("parallel",),
            vmem_limit_bytes=vmem_limit,
        ),
    )(x_ncl, w1_f, b1_2d, w2_f, b2_2d)

    return out[:N, :C_out, :]


if __name__ == "__main__":
    key = jax.random.PRNGKey(0)
    k1, k2, k3, k4, k5 = jax.random.split(key, 5)

    # pure-JAX reference for correctness
    def ref_conv(v, w, b):
        y = jax.lax.conv_general_dilated(
            v, w, window_strides=(2,), padding="VALID",
            dimension_numbers=("NCH", "OIH", "NCH"))
        return y + b[None, :, None]

    # Main check: N=2, C_in=4, C_out=8, L=16
    N, C_in, C_out, L = 2, 4, 8, 16
    x = jax.random.normal(k1, (N, C_in, L), jnp.float32)
    w1 = jax.random.normal(k2, (C_out, C_in, 3), jnp.float32) * 0.2
    b1 = jax.random.normal(k3, (C_out,), jnp.float32) * 0.1
    w2 = jax.random.normal(k4, (C_out, C_out, 3), jnp.float32) * 0.2
    b2 = jax.random.normal(k5, (C_out,), jnp.float32) * 0.1

    out = jax.block_until_ready(conv1d_subsampling(x, w1, b1, w2, b2))
    ref = ref_conv(ref_conv(x, w1, b1), w2, b2)
    assert out.shape == ref.shape == (N, C_out, 3), (out.shape, ref.shape)
    assert jnp.allclose(out, ref, atol=1e-4, rtol=1e-4), float(jnp.max(jnp.abs(out - ref)))

    # Second check exercising the batch-padding / batch-block path (N=3 -> nb=2, grid=2).
    x3 = jax.random.normal(k1, (3, C_in, L), jnp.float32)
    out3 = jax.block_until_ready(conv1d_subsampling(x3, w1, b1, w2, b2))
    ref3 = ref_conv(ref_conv(x3, w1, b1), w2, b2)
    assert out3.shape == ref3.shape == (3, C_out, 3), (out3.shape, ref3.shape)
    assert jnp.allclose(out3, ref3, atol=1e-4, rtol=1e-4), float(jnp.max(jnp.abs(out3 - ref3)))

    print("KERNEL_OK")
</pallas_src>

<mosaic_0001>
module attributes {stable_mosaic.version = 11 : i64} {
  func.func @_conv1d_subsampling_kernel(%arg0: i32, %arg1: memref<1x128x16xf32, #tpu.memory_space<vmem>>, %arg2: memref<384x128xf32, #tpu.memory_space<vmem>>, %arg3: memref<1x128xf32, #tpu.memory_space<vmem>>, %arg4: memref<384x128xf32, #tpu.memory_space<vmem>>, %arg5: memref<1x128xf32, #tpu.memory_space<vmem>>, %arg6: memref<1x128x3xf32, #tpu.memory_space<vmem>>, %arg7: memref<16x128xf32, #tpu.memory_space<vmem>>, %arg8: memref<7x128xf32, #tpu.memory_space<vmem>>) attributes {dimension_semantics = [#tpu.dimension_semantics<parallel>], iteration_bounds = array<i64: 2>, scalar_prefetch = 0 : i64, scratch_operands = 2 : i64, tpu.core_type = #tpu.core_type<tc>, window_params = [{transform_indices = @transform_0, window_bounds = array<i64: 1, 128, 16>}, {pipeline_mode = #tpu.pipeline_mode<synchronous>, transform_indices = @transform_1, window_bounds = array<i64: 384, 128>}, {pipeline_mode = #tpu.pipeline_mode<synchronous>, transform_indices = @transform_2, window_bounds = array<i64: 1, 128>}, {pipeline_mode = #tpu.pipeline_mode<synchronous>, transform_indices = @transform_3, window_bounds = array<i64: 384, 128>}, {pipeline_mode = #tpu.pipeline_mode<synchronous>, transform_indices = @transform_4, window_bounds = array<i64: 1, 128>}, {transform_indices = @transform_5, window_bounds = array<i64: 1, 128, 3>}]} {
    %c0 = arith.constant 0 : index
    %c0_0 = arith.constant 0 : index
    %c0_1 = arith.constant 0 : index
    %0 = vector.load %arg1[%c0, %c0_0, %c0_1] : memref<1x128x16xf32, #tpu.memory_space<vmem>>, vector<1x128x16xf32>
    %1 = vector.shape_cast %0 : vector<1x128x16xf32> to vector<128x16xf32>
    %2 = tpu.transpose %1, [1, 0] : vector<128x16xf32> -> vector<16x128xf32>
    %c0_2 = arith.constant 0 : index
    %c0_3 = arith.constant 0 : index
    %3 = vector.load %arg7[%c0_2, %c0_3] : memref<16x128xf32, #tpu.memory_space<vmem>>, vector<16x128xf32>
    tpu.vector_store %arg7[%c0_2, %c0_3], %2 {strides = array<i32>} : memref<16x128xf32, #tpu.memory_space<vmem>>, vector<16x128xf32>,
    %c0_4 = arith.constant 0 : index
    %c0_5 = arith.constant 0 : index
    %4 = tpu.strided_load %arg7[%c0_4, %c0_5] {strides = array<i32: 2, 1>} : memref<16x128xf32, #tpu.memory_space<vmem>>, vector<7x128xf32>
    %c1 = arith.constant 1 : index
    %c0_6 = arith.constant 0 : index
    %5 = tpu.strided_load %arg7[%c1, %c0_6] {strides = array<i32: 2, 1>} : memref<16x128xf32, #tpu.memory_space<vmem>>, vector<7x128xf32>
    %c2 = arith.constant 2 : index
    %c0_7 = arith.constant 0 : index
    %6 = tpu.strided_load %arg7[%c2, %c0_7] {strides = array<i32: 2, 1>} : memref<16x128xf32, #tpu.memory_space<vmem>>, vector<7x128xf32>
    %7 = tpu.concatenate %4, %5, %6 in 1 : vector<7x128xf32>, vector<7x128xf32>, vector<7x128xf32> -> vector<7x384xf32>
    %c0_8 = arith.constant 0 : index
    %c0_9 = arith.constant 0 : index
    %8 = vector.load %arg2[%c0_8, %c0_9] : memref<384x128xf32, #tpu.memory_space<vmem>>, vector<384x128xf32>
    %cst = arith.constant dense<0.000000e+00> : vector<7x128xf32>
    %9 = tpu.matmul %7, %8, %cst {dimension_numbers = #tpu.dot_dimension_numbers<[1], [0], [0], [1], [0, 0, 1, 1], [], []>} : vector<7x384xf32>, vector<384x128xf32>, vector<7x128xf32> -> vector<7x128xf32>
    %c0_10 = arith.constant 0 : index
    %c0_11 = arith.constant 0 : index
    %10 = vector.load %arg3[%c0_10, %c0_11] : memref<1x128xf32, #tpu.memory_space<vmem>>, vector<1x128xf32>
    %11 = vector.broadcast %10 : vector<1x128xf32> to vector<7x128xf32>
    %12 = arith.addf %9, %11 : vector<7x128xf32>
    %c0_12 = arith.constant 0 : index
    %c0_13 = arith.constant 0 : index
    %13 = vector.load %arg8[%c0_12, %c0_13] : memref<7x128xf32, #tpu.memory_space<vmem>>, vector<7x128xf32>
    tpu.vector_store %arg8[%c0_12, %c0_13], %12 {strides = array<i32>} : memref<7x128xf32, #tpu.memory_space<vmem>>, vector<7x128xf32>,
    %c0_14 = arith.constant 0 : index
    %c0_15 = arith.constant 0 : index
    %14 = tpu.strided_load %arg8[%c0_14, %c0_15] {strides = array<i32: 2, 1>} : memref<7x128xf32, #tpu.memory_space<vmem>>, vector<3x128xf32>
    %c1_16 = arith.constant 1 : index
    %c0_17 = arith.constant 0 : index
    %15 = tpu.strided_load %arg8[%c1_16, %c0_17] {strides = array<i32: 2, 1>} : memref<7x128xf32, #tpu.memory_space<vmem>>, vector<3x128xf32>
    %c2_18 = arith.constant 2 : index
    %c0_19 = arith.constant 0 : index
    %16 = tpu.strided_load %arg8[%c2_18, %c0_19] {strides = array<i32: 2, 1>} : memref<7x128xf32, #tpu.memory_space<vmem>>, vector<3x128xf32>
    %17 = tpu.concatenate %14, %15, %16 in 1 : vector<3x128xf32>, vector<3x128xf32>, vector<3x128xf32> -> vector<3x384xf32>
    %c0_20 = arith.constant 0 : index
    %c0_21 = arith.constant 0 : index
    %18 = vector.load %arg4[%c0_20, %c0_21] : memref<384x128xf32, #tpu.memory_space<vmem>>, vector<384x128xf32>
    %cst_22 = arith.constant dense<0.000000e+00> : vector<3x128xf32>
    %19 = tpu.matmul %17, %18, %cst_22 {dimension_numbers = #tpu.dot_dimension_numbers<[1], [0], [0], [1], [0, 0, 1, 1], [], []>} : vector<3x384xf32>, vector<384x128xf32>, vector<3x128xf32> -> vector<3x128xf32>
    %c0_23 = arith.constant 0 : index
    %c0_24 = arith.constant 0 : index
    %20 = vector.load %arg5[%c0_23, %c0_24] : memref<1x128xf32, #tpu.memory_space<vmem>>, vector<1x128xf32>
    %21 = vector.broadcast %20 : vector<1x128xf32> to vector<3x128xf32>
    %22 = arith.addf %19, %21 : vector<3x128xf32>
    %23 = tpu.transpose %22, [1, 0] : vector<3x128xf32> -> vector<128x3xf32>
    %c0_25 = arith.constant 0 : index
    %c0_26 = arith.constant 0 : index
    %c0_27 = arith.constant 0 : index
    %24 = vector.load %arg6[%c0_25, %c0_26, %c0_27] : memref<1x128x3xf32, #tpu.memory_space<vmem>>, vector<1x128x3xf32>
    %25 = vector.shape_cast %24 : vector<1x128x3xf32> to vector<128x3xf32>
    %26 = vector.shape_cast %23 : vector<128x3xf32> to vector<1x128x3xf32>
    tpu.vector_store %arg6[%c0_25, %c0_26, %c0_27], %26 {strides = array<i32>} : memref<1x128x3xf32, #tpu.memory_space<vmem>>, vector<1x128x3xf32>,
    return
  }
  func.func @transform_0(%arg0: i32) -> (i32, i32, i32) {
    %c0_i32 = arith.constant 0 : i32
    %c0_i32_0 = arith.constant 0 : i32
    %c0_i32_1 = arith.constant 0 : i32
    return %arg0, %c0_i32, %c0_i32_0 : i32, i32, i32
  }
  func.func @transform_1(%arg0: i32) -> (i32, i32) {
    %c0_i32 = arith.constant 0 : i32
    %c0_i32_0 = arith.constant 0 : i32
    %c0_i32_1 = arith.constant 0 : i32
    return %c0_i32, %c0_i32_0 : i32, i32
  }
  func.func @transform_2(%arg0: i32) -> (i32, i32) {
    %c0_i32 = arith.constant 0 : i32
    %c0_i32_0 = arith.constant 0 : i32
    %c0_i32_1 = arith.constant 0 : i32
    return %c0_i32, %c0_i32_0 : i32, i32
  }
  func.func @transform_3(%arg0: i32) -> (i32, i32) {
    %c0_i32 = arith.constant 0 : i32
    %c0_i32_0 = arith.constant 0 : i32
    %c0_i32_1 = arith.constant 0 : i32
    return %c0_i32, %c0_i32_0 : i32, i32
  }
  func.func @transform_4(%arg0: i32) -> (i32, i32) {
    %c0_i32 = arith.constant 0 : i32
    %c0_i32_0 = arith.constant 0 : i32
    %c0_i32_1 = arith.constant 0 : i32
    return %c0_i32, %c0_i32_0 : i32, i32
  }
  func.func @transform_5(%arg0: i32) -> (i32, i32, i32) {
    %c0_i32 = arith.constant 0 : i32
    %c0_i32_0 = arith.constant 0 : i32
    %c0_i32_1 = arith.constant 0 : i32
    return %arg0, %c0_i32, %c0_i32_0 : i32, i32, i32
  }
}

</mosaic_0001>

<llo_original>
// kernel: tpu_custom_call.1
$region0: #{tpu_custom_call.1}
  #allocation0 [shape = 'u32[]', space=smem, size = 0x4, offset = 0x4, fixed_abs, tag = 'smem constant byte address 0x4 - core index']
  #allocation1 [shape = 'u32[144,128]{1,0:T(1,128)}', space=vmem, size = 0x12000, scoped, tag = 'internal scratch']
  #allocation2 [shape = 'f32[16,128]{1,0:T(8,128)}', space=vmem, size = 0x2000, scoped, tag = 'scratch operand']
  #allocation3 [shape = 'f32[7,128]{1,0:T(8,128)}', space=vmem, size = 0x1000, scoped, tag = 'scratch operand']
  %s0 = inlined_call_operand.vmem [shape: f32[2,128,16], index: 0, kind: input, shape index: {}]
  %s1 = inlined_call_operand.hbm [shape: f32[384,128], index: 1, kind: input, shape index: {}]
  %s2 = inlined_call_operand.vmem [shape: f32[1,128], index: 2, kind: input, shape index: {}]
  %s3 = inlined_call_operand.hbm [shape: f32[384,128], index: 3, kind: input, shape index: {}]
  %s4 = inlined_call_operand.vmem [shape: f32[1,128], index: 4, kind: input, shape index: {}]
  %s5 = inlined_call_operand.vmem [shape: f32[2,128,3], index: 5, kind: output, shape index: {}]
  %s6 = sld [smem:[#allocation0]]
  $region61: #{tpu_custom_call.1} parent=0
    _
  %s8 = ssub.s32 1, %s6
  %s9 = scalar_select 0, %s8, %s6
  $region1: #{tpu_custom_call.1} parent=0
    #allocation4 [shape = 'u8[196608]{0}', space=vmem, size = 0x30000, scoped, tag = 'input window, operand 1, single buffered']
    #allocation5 [shape = 's32[2]{0}', space=sflag, size = 0x8, scoped, tag = 'scoped memory for tpu_custom_call.1']
    #allocation6 [shape = 'u8[196608]{0}', space=vmem, size = 0x30000, scoped, tag = 'input window, operand 3, single buffered']
    #allocation7 [shape = 's32[1]{0}', space=sflag, size = 0x4, scoped, tag = 'scoped memory for tpu_custom_call.1']
    %10 = vsyncpa [#allocation5], 0
    %11 = vsyncpa [#allocation7], 0
    loop: start=0, step=1, limit=4
    $region2: #{tpu_custom_call.1} parent=1 // loop_pre_header
      _
    $region3: #{tpu_custom_call.1} parent=1 // loop_header
      %s13 = sphi 0, %s17
      %p14 = scmp.ge.s32.totalorder %s13, 4
      %s23 = sphi 0, %s25
      %s26 = sphi 0, %s23
      %s27 = sphi 0, %s26
      %s43 = sphi 0, %s27
      %s47 = sphi 0, %s47
      %s49 = sphi 0, %s47
      %s50 = sphi 0, %s49
      %s64 = sphi 0, %s50
      %s68 = sphi 0, %s68
      %s70 = sphi 0, %s68
      %s71 = sphi 0, %s70
      %s85 = sphi 0, %s71
      %s89 = sphi 0, %s89
      %s91 = sphi 0, %s89
      %s92 = sphi 0, %s91
      %s106 = sphi 0, %s92
      %s110 = sphi 0, %s110
      %s112 = sphi 0, %s110
      %s113 = sphi 0, %s112
      %s127 = sphi 0, %s113
      %s133 = sphi 0, %s135
      %s136 = sphi 0, %s133
      %s137 = sphi 0, %s136
      %s153 = sphi 0, %s137
    $region4: #{tpu_custom_call.1} parent=1 // loop_header_branch
      %16 = sbr.rel (%p14) target = $region8
    $region5: #{tpu_custom_call.1} parent=1 // loop_body
      %s18 = ssub.s32 %s13, 1
      %s19 = ssub.s32 %s13, 2
      %s20 = sadd.s32 %s13, 1
      %s21 = ssub.s32 %s13, %s20
      %p22 = scmp.eq.s32.totalorder %s21, 0
      %s24 = sadd.s32 %s23, 1
      %s25 = scalar_select %p22, %s23, %s24
      %p28 = pneg %p22
      %p29 = scmp.eq.s32.totalorder %s13, 1
      %p30 = por %p28, %p29
      %p31 = scmp.ne.s32.totalorder %s23, %s26
      %p32 = scmp.eq.s32.totalorder %s13, 0
      %p33 = por %p31, %p32
      %p34 = scmp.ne.s32.totalorder %s23, %s26
      %p35 = scmp.eq.s32.totalorder %s18, 1
      %p36 = por %p34, %p35
      %p37 = scmp.ne.s32.totalorder %s26, %s27
      %p38 = scmp.eq.s32.totalorder %s18, 0
      %p39 = por %p37, %p38
      %p40 = scmp.ne.s32.totalorder %s26, %s27
      %p41 = scmp.eq.s32.totalorder %s19, 1
      %p42 = por %p40, %p41
      %p44 = scmp.ne.s32.totalorder %s27, %s43
      %p45 = scmp.eq.s32.totalorder %s19, 0
      %p46 = por %p44, %p45
      %s48 = sadd.s32 %s47, 1
      %p51 = scmp.eq.s32.totalorder %s13, 1
      %p52 = scmp.ne.s32.totalorder %s47, %s49
      %p53 = scmp.eq.s32.totalorder %s13, 0
      %p54 = por %p52, %p53
      %p55 = scmp.ne.s32.totalorder %s47, %s49
      %p56 = scmp.eq.s32.totalorder %s18, 1
      %p57 = por %p55, %p56
      %p58 = scmp.ne.s32.totalorder %s49, %s50
      %p59 = scmp.eq.s32.totalorder %s18, 0
      %p60 = por %p58, %p59
      %p61 = scmp.ne.s32.totalorder %s49, %s50
      %p62 = scmp.eq.s32.totalorder %s19, 1
      %p63 = por %p61, %p62
      %p65 = scmp.ne.s32.totalorder %s50, %s64
      %p66 = scmp.eq.s32.totalorder %s19, 0
      %p67 = por %p65, %p66
      %s69 = sadd.s32 %s68, 1
      %p72 = scmp.eq.s32.totalorder %s13, 1
      %p73 = scmp.ne.s32.totalorder %s68, %s70
      %p74 = scmp.eq.s32.totalorder %s13, 0
      %p75 = por %p73, %p74
      %p76 = scmp.ne.s32.totalorder %s68, %s70
      %p77 = scmp.eq.s32.totalorder %s18, 1
      %p78 = por %p76, %p77
      %p79 = scmp.ne.s32.totalorder %s70, %s71
      %p80 = scmp.eq.s32.totalorder %s18, 0
      %p81 = por %p79, %p80
      %p82 = scmp.ne.s32.totalorder %s70, %s71
      %p83 = scmp.eq.s32.totalorder %s19, 1
      %p84 = por %p82, %p83
      %p86 = scmp.ne.s32.totalorder %s71, %s85
      %p87 = scmp.eq.s32.totalorder %s19, 0
      %p88 = por %p86, %p87
      %s90 = sadd.s32 %s89, 1
      %p93 = scmp.eq.s32.totalorder %s13, 1
      %p94 = scmp.ne.s32.totalorder %s89, %s91
      %p95 = scmp.eq.s32.totalorder %s13, 0
      %p96 = por %p94, %p95
      %p97 = scmp.ne.s32.totalorder %s89, %s91
      %p98 = scmp.eq.s32.totalorder %s18, 1
      %p99 = por %p97, %p98
      %p100 = scmp.ne.s32.totalorder %s91, %s92
      %p101 = scmp.eq.s32.totalorder %s18, 0
      %p102 = por %p100, %p101
      %p103 = scmp.ne.s32.totalorder %s91, %s92
      %p104 = scmp.eq.s32.totalorder %s19, 1
      %p105 = por %p103, %p104
      %p107 = scmp.ne.s32.totalorder %s92, %s106
      %p108 = scmp.eq.s32.totalorder %s19, 0
      %p109 = por %p107, %p108
      %s111 = sadd.s32 %s110, 1
      %p114 = scmp.eq.s32.totalorder %s13, 1
      %p115 = scmp.ne.s32.totalorder %s110, %s112
      %p116 = scmp.eq.s32.totalorder %s13, 0
      %p117 = por %p115, %p116
      %p118 = scmp.ne.s32.totalorder %s110, %s112
      %p119 = scmp.eq.s32.totalorder %s18, 1
      %p120 = por %p118, %p119
      %p121 = scmp.ne.s32.totalorder %s112, %s113
      %p122 = scmp.eq.s32.totalorder %s18, 0
      %p123 = por %p121, %p122
      %p124 = scmp.ne.s32.totalorder %s112, %s113
      %p125 = scmp.eq.s32.totalorder %s19, 1
      %p126 = por %p124, %p125
      %p128 = scmp.ne.s32.totalorder %s113, %s127
      %p129 = scmp.eq.s32.totalorder %s19, 0
      %p130 = por %p128, %p129
      %s131 = ssub.s32 %s13, %s20
      %p132 = scmp.eq.s32.totalorder %s131, 0
      %s134 = sadd.s32 %s133, 1
      %s135 = scalar_select %p132, %s133, %s134
      %p138 = pneg %p132
      %p139 = scmp.eq.s32.totalorder %s13, 1
      %p140 = por %p138, %p139
      %p141 = scmp.ne.s32.totalorder %s133, %s136
      %p142 = scmp.eq.s32.totalorder %s13, 0
      %p143 = por %p141, %p142
      %p144 = scmp.ne.s32.totalorder %s133, %s136
      %p145 = scmp.eq.s32.totalorder %s18, 1
      %p146 = por %p144, %p145
      %p147 = scmp.ne.s32.totalorder %s136, %s137
      %p148 = scmp.eq.s32.totalorder %s18, 0
      %p149 = por %p147, %p148
      %p150 = scmp.ne.s32.totalorder %s136, %s137
      %p151 = scmp.eq.s32.totalorder %s19, 1
      %p152 = por %p150, %p151
      %p154 = scmp.ne.s32.totalorder %s137, %s153
      %p155 = scmp.eq.s32.totalorder %s19, 0
      %p156 = por %p154, %p155
      %p157 = scmp.le.s32.totalorder 1, %s13
      %p158 = scmp.lt.s32.totalorder %s13, 3
      %p159 = pnand %p157, %p158
      %p160 = pneg %p159
      // Predicated region
      $region9: #{tpu_custom_call.1} parent=5 // pred_check
        _
      $region10: #{tpu_custom_call.1} parent=5 // pred_check_branch
        %162 = sbr.rel (%p159) target = $region12
      $region11: #{tpu_custom_call.1} parent=5 // pred_region
        %s163 = ssub.s32 %s13, 1
        // Predicated region
        $region13: #{tpu_custom_call.1} parent=11 // pred_check
          %p164 = pneg %p60
        $region14: #{tpu_custom_call.1} parent=11 // pred_check_branch
          %166 = sbr.rel (%p164) target = $region16
        $region15: #{tpu_custom_call.1} parent=11 // pred_region
          %s168 = ssub.s32 6144, 6144
          %169 = vsyncadd [#allocation5], %s168
          %s170 = sshll.u32 [#allocation4], 4
          %s171 = int_to_ptr.vmem [resolvable:$true] %s170
          %176 = dma.hbm_to_vmem [thread:$0]  %s1, 6144, %s171, [#allocation5], 128, 128, 8
        $region16: #{tpu_custom_call.1} parent=11 // pred_fallthru
          _
        // Predicated region
        $region17: #{tpu_custom_call.1} parent=11 // pred_check
          %p177 = pneg %p81
        $region18: #{tpu_custom_call.1} parent=11 // pred_check_branch
          %179 = sbr.rel (%p177) target = $region20
        $region19: #{tpu_custom_call.1} parent=11 // pred_region
          _
        $region20: #{tpu_custom_call.1} parent=11 // pred_fallthru
          _
        // Predicated region
        $region21: #{tpu_custom_call.1} parent=11 // pred_check
          %p180 = pneg %p102
        $region22: #{tpu_custom_call.1} parent=11 // pred_check_branch
          %182 = sbr.rel (%p180) target = $region24
        $region23: #{tpu_custom_call.1} parent=11 // pred_region
          %s184 = ssub.s32 6144, 6144
          %185 = vsyncadd [#allocation7], %s184
          %s186 = sshll.u32 [#allocation6], 4
          %s187 = int_to_ptr.vmem [resolvable:$true] %s186
          %192 = dma.hbm_to_vmem [thread:$0]  %s3, 6144, %s187, [#allocation7], 128, 128, 8
        $region24: #{tpu_custom_call.1} parent=11 // pred_fallthru
          _
        // Predicated region
        $region25: #{tpu_custom_call.1} parent=11 // pred_check
          %p193 = pneg %p123
        $region26: #{tpu_custom_call.1} parent=11 // pred_check_branch
          %195 = sbr.rel (%p193) target = $region28
        $region27: #{tpu_custom_call.1} parent=11 // pred_region
          _
        $region28: #{tpu_custom_call.1} parent=11 // pred_fallthru
          _
      $region12: #{tpu_custom_call.1} parent=5 // pred_fallthru
        _
      %p196 = scmp.lt.s32.totalorder %s13, 2
      // Predicated region
      $region29: #{tpu_custom_call.1} parent=5 // pred_check
        %p197 = pneg %p196
      $region30: #{tpu_custom_call.1} parent=5 // pred_check_branch
        %199 = sbr.rel (%p197) target = $region32
      $region31: #{tpu_custom_call.1} parent=5 // pred_region
        // Predicated region
        $region33: #{tpu_custom_call.1} parent=31 // pred_check
          %p200 = pneg %p33
        $region34: #{tpu_custom_call.1} parent=31 // pred_check_branch
          %202 = sbr.rel (%p200) target = $region36
        $region35: #{tpu_custom_call.1} parent=31 // pred_region
          %p203 = scmp.lt.s32.totalorder %s13, 1
          %s204 = scalar_select %p203, %s13, 1
          %s205 = smul.addr %s204, 16
          %s206 = smul.addr %s205, 8
          %s207 = scalar_lea.vmem %s0, %s206
        $region36: #{tpu_custom_call.1} parent=31 // pred_fallthru
          _
      $region32: #{tpu_custom_call.1} parent=5 // pred_fallthru
        _
      %p208 = scmp.le.s32.totalorder 1, %s13
      %p209 = scmp.lt.s32.totalorder %s13, 3
      %p210 = pnand %p208, %p209
      %p211 = pneg %p210
      // Predicated region
      $region37: #{tpu_custom_call.1} parent=5 // pred_check
        _
      $region38: #{tpu_custom_call.1} parent=5 // pred_check_branch
        %213 = sbr.rel (%p210) target = $region40
      $region39: #{tpu_custom_call.1} parent=5 // pred_region
        %s214 = ssub.s32 %s13, 1
        // Predicated region
        $region41: #{tpu_custom_call.1} parent=39 // pred_check
          %p215 = pneg %p60
        $region42: #{tpu_custom_call.1} parent=39 // pred_check_branch
          %217 = sbr.rel (%p215) target = $region44
        $region43: #{tpu_custom_call.1} parent=39 // pred_region
          %218 = dma.done [#allocation5], 6144
        $region44: #{tpu_custom_call.1} parent=39 // pred_fallthru
          _
        // Predicated region
        $region45: #{tpu_custom_call.1} parent=39 // pred_check
          %p219 = pneg %p102
        $region46: #{tpu_custom_call.1} parent=39 // pred_check_branch
          %221 = sbr.rel (%p219) target = $region48
        $region47: #{tpu_custom_call.1} parent=39 // pred_region
          %222 = dma.done [#allocation7], 6144
        $region48: #{tpu_custom_call.1} parent=39 // pred_fallthru
          _
        %p223 = scmp.lt.s32.totalorder %s18, 1
        %s224 = scalar_select %p223, %s18, 1
        %s225 = smul.addr %s224, 16
        %s226 = smul.addr %s225, 8
        %s227 = scalar_lea.vmem %s0, %s226
        %p228 = pneg %p39
        %p229 = pneg %p36
        %p230 = pneg %p60
        %p231 = pneg %p57
        %p232 = pneg %p81
        %p233 = pneg %p78
        %p234 = pneg %p102
        %p235 = pneg %p99
        %p236 = pneg %p123
        %p237 = pneg %p120
        %p238 = pneg %p149
        %p239 = pneg %p146
        %p240 = scmp.lt.s32.totalorder %s18, 1
        %s241 = scalar_select %p240, %s18, 1
        %s242 = smul.addr %s241, 16
        %s243 = smul.addr %s242, 8
        %s244 = scalar_lea.vmem %s5, %s243
        %p245 = scmp.lt.s32.totalorder %s18, 1
        %s246 = scalar_select %p245, %s18, 1
        %s247 = smul.addr %s246, 16
        %s248 = smul.addr %s247, 8
        %s249 = scalar_lea.vmem %s0, %s248
        %p250 = scmp.lt.s32.totalorder %s18, 1
        %s251 = scalar_select %p250, %s18, 1
        %s252 = smul.addr %s251, 16
        %s253 = smul.addr %s252, 8
        %s254 = scalar_lea.vmem %s5, %s253
        %v255 = vld [vmem:[%s249] sm:$0xff]
        %v256 = vld [vmem:[%s249 + $0x8] sm:$0xff]
        %v257 = vld [vmem:[%s249 + $0x10] sm:$0xff]
        %v258 = vld [vmem:[%s249 + $0x18] sm:$0xff]
        %v259 = vld [vmem:[%s249 + $0x20] sm:$0xff]
        %v260 = vld [vmem:[%s249 + $0x28] sm:$0xff]
        %v261 = vld [vmem:[%s249 + $0x30] sm:$0xff]
        %v262 = vld [vmem:[%s249 + $0x38] sm:$0xff]
        %v263 = vld [vmem:[%s249 + $0x40] sm:$0xff]
        %v264 = vld [vmem:[%s249 + $0x48] sm:$0xff]
        %v265 = vld [vmem:[%s249 + $0x50] sm:$0xff]
        %v266 = vld [vmem:[%s249 + $0x58] sm:$0xff]
        %v267 = vld [vmem:[%s249 + $0x60] sm:$0xff]
        %v268 = vld [vmem:[%s249 + $0x68] sm:$0xff]
        %v269 = vld [vmem:[%s249 + $0x70] sm:$0xff]
        %v270 = vld [vmem:[%s249 + $0x78] sm:$0xff]
        %271 = vxpose.xlu0.b32.start [1/16] %v255, 128
        %272 = vxpose.xlu0.b32.cont [2/16] %v256, 128
        %273 = vxpose.xlu0.b32.cont [3/16] %v257, 128
        %274 = vxpose.xlu0.b32.cont [4/16] %v258, 128
        %275 = vxpose.xlu0.b32.cont [5/16] %v259, 128
        %276 = vxpose.xlu0.b32.cont [6/16] %v260, 128
        %277 = vxpose.xlu0.b32.cont [7/16] %v261, 128
        %278 = vxpose.xlu0.b32.cont [8/16] %v262, 128
        %279 = vxpose.xlu0.b32.cont [9/16] %v263, 128
        %280 = vxpose.xlu0.b32.cont [10/16] %v264, 128
        %281 = vxpose.xlu0.b32.cont [11/16] %v265, 128
        %282 = vxpose.xlu0.b32.cont [12/16] %v266, 128
        %283 = vxpose.xlu0.b32.cont [13/16] %v267, 128
        %284 = vxpose.xlu0.b32.cont [14/16] %v268, 128
        %285 = vxpose.xlu0.b32.cont [15/16] %v269, 128
        %286 = vxpose.xlu0.b32.end [16/16] %v270, 128
        %v287 = vpop.trf.xlu0
        %v288 = vpop.trf.xlu0
        %v289 = vpop.trf.xlu0
        %v290 = vpop.trf.xlu0
        %v291 = vpop.trf.xlu0
        %v292 = vpop.trf.xlu0
        %v293 = vpop.trf.xlu0
        %v294 = vpop.trf.xlu0
        %v295 = vpop.trf.xlu0
        %v296 = vpop.trf.xlu0
        %v297 = vpop.trf.xlu0
        %v298 = vpop.trf.xlu0
        %v299 = vpop.trf.xlu0
        %v300 = vpop.trf.xlu0
        %v301 = vpop.trf.xlu0
        %v302 = vpop.trf.xlu0
        %303 = vst [vmem:[#allocation2] sm:$0xff] %v287
        %304 = vst [vmem:[#allocation2 + $0x8] sm:$0xff] %v288
        %v305 = vld [vmem:[#allocation2] ss:$2 sm:$0x7f]
        %s306 = scalar_lea.vmem [#allocation2], 1
        %v307 = vld [vmem:[%s306] ss:$2 sm:$0x7f]
        %s308 = scalar_lea.vmem [#allocation2], 2
        %v309 = vld [vmem:[%s308] ss:$2 sm:$0x7f]
        %v310 = vld [vmem:[#allocation4] sm:$0xff]
        %v311 = vld [vmem:[#allocation4 + $0x8] sm:$0xff]
        %v312 = vld [vmem:[#allocation4 + $0x10] sm:$0xff]
        %v313 = vld [vmem:[#allocation4 + $0x18] sm:$0xff]
        %v314 = vld [vmem:[#allocation4 + $0x20] sm:$0xff]
        %v315 = vld [vmem:[#allocation4 + $0x28] sm:$0xff]
        %v316 = vld [vmem:[#allocation4 + $0x30] sm:$0xff]
        %v317 = vld [vmem:[#allocation4 + $0x38] sm:$0xff]
        %v318 = vld [vmem:[#allocation4 + $0x40] sm:$0xff]
        %v319 = vld [vmem:[#allocation4 + $0x48] sm:$0xff]
        %v320 = vld [vmem:[#allocation4 + $0x50] sm:$0xff]
        %v321 = vld [vmem:[#allocation4 + $0x58] sm:$0xff]
        %v322 = vld [vmem:[#allocation4 + $0x60] sm:$0xff]
        %v323 = vld [vmem:[#allocation4 + $0x68] sm:$0xff]
        %v324 = vld [vmem:[#allocation4 + $0x70] sm:$0xff]
        %v325 = vld [vmem:[#allocation4 + $0x78] sm:$0xff]
        %v326 = vld [vmem:[#allocation4 + $0x80] sm:$0xff]
        %v327 = vld [vmem:[#allocation4 + $0x88] sm:$0xff]
        %v328 = vld [vmem:[#allocation4 + $0x90] sm:$0xff]
        %v329 = vld [vmem:[#allocation4 + $0x98] sm:$0xff]
        %v330 = vld [vmem:[#allocation4 + $0xa0] sm:$0xff]
        %v331 = vld [vmem:[#allocation4 + $0xa8] sm:$0xff]
        %v332 = vld [vmem:[#allocation4 + $0xb0] sm:$0xff]
        %v333 = vld [vmem:[#allocation4 + $0xb8] sm:$0xff]
        %v334 = vld [vmem:[#allocation4 + $0xc0] sm:$0xff]
        %v335 = vld [vmem:[#allocation4 + $0xc8] sm:$0xff]
        %v336 = vld [vmem:[#allocation4 + $0xd0] sm:$0xff]
        %v337 = vld [vmem:[#allocation4 + $0xd8] sm:$0xff]
        %v338 = vld [vmem:[#allocation4 + $0xe0] sm:$0xff]
        %v339 = vld [vmem:[#allocation4 + $0xe8] sm:$0xff]
        %v340 = vld [vmem:[#allocation4 + $0xf0] sm:$0xff]
        %v341 = vld [vmem:[#allocation4 + $0xf8] sm:$0xff]
        %v342 = vld [vmem:[#allocation4 + $0x100] sm:$0xff]
        %v343 = vld [vmem:[#allocation4 + $0x108] sm:$0xff]
        %v344 = vld [vmem:[#allocation4 + $0x110] sm:$0xff]
        %v345 = vld [vmem:[#allocation4 + $0x118] sm:$0xff]
        %v346 = vld [vmem:[#allocation4 + $0x120] sm:$0xff]
        %v347 = vld [vmem:[#allocation4 + $0x128] sm:$0xff]
        %v348 = vld [vmem:[#allocation4 + $0x130] sm:$0xff]
        %v349 = vld [vmem:[#allocation4 + $0x138] sm:$0xff]
        %v350 = vld [vmem:[#allocation4 + $0x140] sm:$0xff]
        %v351 = vld [vmem:[#allocation4 + $0x148] sm:$0xff]
        %v352 = vld [vmem:[#allocation4 + $0x150] sm:$0xff]
        %v353 = vld [vmem:[#allocation4 + $0x158] sm:$0xff]
        %v354 = vld [vmem:[#allocation4 + $0x160] sm:$0xff]
        %v355 = vld [vmem:[#allocation4 + $0x168] sm:$0xff]
        %v356 = vld [vmem:[#allocation4 + $0x170] sm:$0xff]
        %v357 = vld [vmem:[#allocation4 + $0x178] sm:$0xff]
        %v358 = vld [vmem:[%s2] sm:$0x1]
        %v360 = vlaneseq
        %v361 = vshrl.u32 %v360, 7
        %v362 = vsub.s32 0, %v361
        %v363 = vrot.slane %v358, %v362
        %365 = vmatprep.subr.mxu0 0.0
        %366 = vmatpush1.msra.mxu0 %v325
        %367 = vmatprep.subr.mxu0 0.0
        %368 = vmatpush1.msra.mxu0 %v324
        %369 = vmatprep.subr.mxu0 0.0
        %370 = vmatpush1.msra.mxu0 %v323
        %371 = vmatprep.subr.mxu0 0.0
        %372 = vmatpush1.msra.mxu0 %v322
        %373 = vmatprep.subr.mxu0 0.0
        %374 = vmatpush1.msra.mxu0 %v321
        %375 = vmatprep.subr.mxu0 0.0
        %376 = vmatpush1.msra.mxu0 %v320
        %377 = vmatprep.subr.mxu0 0.0
        %378 = vmatpush1.msra.mxu0 %v319
        %379 = vmatprep.subr.mxu0 0.0
        %380 = vmatpush1.msra.mxu0 %v318
        %381 = vmatprep.subr.mxu0 0.0
        %382 = vmatpush1.msra.mxu0 %v317
        %383 = vmatprep.subr.mxu0 0.0
        %384 = vmatpush1.msra.mxu0 %v316
        %385 = vmatprep.subr.mxu0 0.0
        %386 = vmatpush1.msra.mxu0 %v315
        %387 = vmatprep.subr.mxu0 0.0
        %388 = vmatpush1.msra.mxu0 %v314
        %389 = vmatprep.subr.mxu0 0.0
        %390 = vmatpush1.msra.mxu0 %v313
        %391 = vmatprep.subr.mxu0 0.0
        %392 = vmatpush1.msra.mxu0 %v312
        %393 = vmatprep.subr.mxu0 0.0
        %394 = vmatpush1.msra.mxu0 %v311
        %395 = vmatprep.subr.mxu0 0.0
        %396 = vmatpush1.msra.mxu0 %v310
        %397 = vmatprep.subr.mxu0 0.0
        %398 = vmatpush2.msra.mxu0 %v341
        %399 = vmatprep.subr.mxu0 0.0
        %400 = vmatpush2.msra.mxu0 %v340
        %401 = vmatprep.subr.mxu0 0.0
        %402 = vmatpush2.msra.mxu0 %v339
        %403 = vmatprep.subr.mxu0 0.0
        %404 = vmatpush2.msra.mxu0 %v338
        %405 = vmatprep.subr.mxu0 0.0
        %406 = vmatpush2.msra.mxu0 %v337
        %407 = vmatprep.subr.mxu0 0.0
        %408 = vmatpush2.msra.mxu0 %v336
        %409 = vmatprep.subr.mxu0 0.0
        %410 = vmatpush2.msra.mxu0 %v335
        %411 = vmatprep.subr.mxu0 0.0
        %412 = vmatpush2.msra.mxu0 %v334
        %413 = vmatprep.subr.mxu0 0.0
        %414 = vmatpush2.msra.mxu0 %v333
        %415 = vmatprep.subr.mxu0 0.0
        %416 = vmatpush2.msra.mxu0 %v332
        %417 = vmatprep.subr.mxu0 0.0
        %418 = vmatpush2.msra.mxu0 %v331
        %419 = vmatprep.subr.mxu0 0.0
        %420 = vmatpush2.msra.mxu0 %v330
        %421 = vmatprep.subr.mxu0 0.0
        %422 = vmatpush2.msra.mxu0 %v329
        %423 = vmatprep.subr.mxu0 0.0
        %424 = vmatpush2.msra.mxu0 %v328
        %425 = vmatprep.subr.mxu0 0.0
        %426 = vmatpush2.msra.mxu0 %v327
        %427 = vmatprep.subr.mxu0 0.0
        %428 = vmatpush2.msra.mxu0 %v326
        %429 = vmatprep.mubr.f32.mxu0 %v307
        %430 = vmatmul.mubr.f32.gmra.mxu0 %v305
        %v431 = vpop.f32.mrf.mxu0
        %v432 = vadd.f32 %v363, %v431
        %v433 = vpop.f32.mrf.mxu0
        %434 = vdwg.mxu0
        %435 = vmatprep.subr.mxu0 0.0
        %436 = vmatpush1.msra.mxu0 %v357
        %437 = vmatprep.subr.mxu0 0.0
        %438 = vmatpush1.msra.mxu0 %v356
        %439 = vmatprep.subr.mxu0 0.0
        %440 = vmatpush1.msra.mxu0 %v355
        %441 = vmatprep.subr.mxu0 0.0
        %442 = vmatpush1.msra.mxu0 %v354
        %443 = vmatprep.subr.mxu0 0.0
        %444 = vmatpush1.msra.mxu0 %v353
        %445 = vmatprep.subr.mxu0 0.0
        %446 = vmatpush1.msra.mxu0 %v352
        %447 = vmatprep.subr.mxu0 0.0
        %448 = vmatpush1.msra.mxu0 %v351
        %449 = vmatprep.subr.mxu0 0.0
        %450 = vmatpush1.msra.mxu0 %v350
        %451 = vmatprep.subr.mxu0 0.0
        %452 = vmatpush1.msra.mxu0 %v349
        %453 = vmatprep.subr.mxu0 0.0
        %454 = vmatpush1.msra.mxu0 %v348
        %455 = vmatprep.subr.mxu0 0.0
        %456 = vmatpush1.msra.mxu0 %v347
        %457 = vmatprep.subr.mxu0 0.0
        %458 = vmatpush1.msra.mxu0 %v346
        %459 = vmatprep.subr.mxu0 0.0
        %460 = vmatpush1.msra.mxu0 %v345
        %461 = vmatprep.subr.mxu0 0.0
        %462 = vmatpush1.msra.mxu0 %v344
        %463 = vmatprep.subr.mxu0 0.0
        %464 = vmatpush1.msra.mxu0 %v343
        %465 = vmatprep.subr.mxu0 0.0
        %466 = vmatpush1.msra.mxu0 %v342
        %467 = vmatprep.subr.mxu0 0.0
        %468 = vmatpush2.msra.mxu0 0.0
        %469 = vmatprep.subr.mxu0 0.0
        %470 = vmatpush2.msra.mxu0 0.0
        %471 = vmatprep.subr.mxu0 0.0
        %472 = vmatpush2.msra.mxu0 0.0
        %473 = vmatprep.subr.mxu0 0.0
        %474 = vmatpush2.msra.mxu0 0.0
        %475 = vmatprep.subr.mxu0 0.0
        %476 = vmatpush2.msra.mxu0 0.0
        %477 = vmatprep.subr.mxu0 0.0
        %478 = vmatpush2.msra.mxu0 0.0
        %479 = vmatprep.subr.mxu0 0.0
        %480 = vmatpush2.msra.mxu0 0.0
        %481 = vmatprep.subr.mxu0 0.0
        %482 = vmatpush2.msra.mxu0 0.0
        %483 = vmatprep.subr.mxu0 0.0
        %484 = vmatpush2.msra.mxu0 0.0
        %485 = vmatprep.subr.mxu0 0.0
        %486 = vmatpush2.msra.mxu0 0.0
        %487 = vmatprep.subr.mxu0 0.0
        %488 = vmatpush2.msra.mxu0 0.0
        %489 = vmatprep.subr.mxu0 0.0
        %490 = vmatpush2.msra.mxu0 0.0
        %491 = vmatprep.subr.mxu0 0.0
        %492 = vmatpush2.msra.mxu0 0.0
        %493 = vmatprep.subr.mxu0 0.0
        %494 = vmatpush2.msra.mxu0 0.0
        %495 = vmatprep.subr.mxu0 0.0
        %496 = vmatpush2.msra.mxu0 0.0
        %497 = vmatprep.subr.mxu0 0.0
        %498 = vmatpush2.msra.mxu0 0.0
        %499 = vmatprep.mubr.f32.mxu0 0.0
        %500 = vmatmul.mubr.f32.gmra.mxu0 %v309
        %v501 = vpop.f32.mrf.mxu0
        %v502 = vadd.f32 %v432, %v501
        %v503 = vpop.f32.mrf.mxu0
        %504 = vdwg.mxu0
        %505 = vst [vmem:[#allocation3] sm:$0x7f] %v502
        %v506 = vld [vmem:[#allocation3] ss:$2 sm:$0x7]
        %s507 = scalar_lea.vmem [#allocation3], 1
        %v508 = vld [vmem:[%s507] ss:$2 sm:$0x7]
        %s509 = scalar_lea.vmem [#allocation3], 2
        %v510 = vld [vmem:[%s509] ss:$2 sm:$0x7]
        %v511 = vld [vmem:[#allocation6] sm:$0xff]
        %v512 = vld [vmem:[#allocation6 + $0x8] sm:$0xff]
        %v513 = vld [vmem:[#allocation6 + $0x10] sm:$0xff]
        %v514 = vld [vmem:[#allocation6 + $0x18] sm:$0xff]
        %v515 = vld [vmem:[#allocation6 + $0x20] sm:$0xff]
        %v516 = vld [vmem:[#allocation6 + $0x28] sm:$0xff]
        %v517 = vld [vmem:[#allocation6 + $0x30] sm:$0xff]
        %v518 = vld [vmem:[#allocation6 + $0x38] sm:$0xff]
        %v519 = vld [vmem:[#allocation6 + $0x40] sm:$0xff]
        %v520 = vld [vmem:[#allocation6 + $0x48] sm:$0xff]
        %v521 = vld [vmem:[#allocation6 + $0x50] sm:$0xff]
        %v522 = vld [vmem:[#allocation6 + $0x58] sm:$0xff]
        %v523 = vld [vmem:[#allocation6 + $0x60] sm:$0xff]
        %v524 = vld [vmem:[#allocation6 + $0x68] sm:$0xff]
        %v525 = vld [vmem:[#allocation6 + $0x70] sm:$0xff]
        %v526 = vld [vmem:[#allocation6 + $0x78] sm:$0xff]
        %v527 = vld [vmem:[#allocation6 + $0x80] sm:$0xff]
        %v528 = vld [vmem:[#allocation6 + $0x88] sm:$0xff]
        %v529 = vld [vmem:[#allocation6 + $0x90] sm:$0xff]
        %v530 = vld [vmem:[#allocation6 + $0x98] sm:$0xff]
        %v531 = vld [vmem:[#allocation6 + $0xa0] sm:$0xff]
        %v532 = vld [vmem:[#allocation6 + $0xa8] sm:$0xff]
        %v533 = vld [vmem:[#allocation6 + $0xb0] sm:$0xff]
        %v534 = vld [vmem:[#allocation6 + $0xb8] sm:$0xff]
        %v535 = vld [vmem:[#allocation6 + $0xc0] sm:$0xff]
        %v536 = vld [vmem:[#allocation6 + $0xc8] sm:$0xff]
        %v537 = vld [vmem:[#allocation6 + $0xd0] sm:$0xff]
        %v538 = vld [vmem:[#allocation6 + $0xd8] sm:$0xff]
        %v539 = vld [vmem:[#allocation6 + $0xe0] sm:$0xff]
        %v540 = vld [vmem:[#allocation6 + $0xe8] sm:$0xff]
        %v541 = vld [vmem:[#allocation6 + $0xf0] sm:$0xff]
        %v542 = vld [vmem:[#allocation6 + $0xf8] sm:$0xff]
        %v543 = vld [vmem:[#allocation6 + $0x100] sm:$0xff]
        %v544 = vld [vmem:[#allocation6 + $0x108] sm:$0xff]
        %v545 = vld [vmem:[#allocation6 + $0x110] sm:$0xff]
        %v546 = vld [vmem:[#allocation6 + $0x118] sm:$0xff]
        %v547 = vld [vmem:[#allocation6 + $0x120] sm:$0xff]
        %v548 = vld [vmem:[#allocation6 + $0x128] sm:$0xff]
        %v549 = vld [vmem:[#allocation6 + $0x130] sm:$0xff]
        %v550 = vld [vmem:[#allocation6 + $0x138] sm:$0xff]
        %v551 = vld [vmem:[#allocation6 + $0x140] sm:$0xff]
        %v552 = vld [vmem:[#allocation6 + $0x148] sm:$0xff]
        %v553 = vld [vmem:[#allocation6 + $0x150] sm:$0xff]
        %v554 = vld [vmem:[#allocation6 + $0x158] sm:$0xff]
        %v555 = vld [vmem:[#allocation6 + $0x160] sm:$0xff]
        %v556 = vld [vmem:[#allocation6 + $0x168] sm:$0xff]
        %v557 = vld [vmem:[#allocation6 + $0x170] sm:$0xff]
        %v558 = vld [vmem:[#allocation6 + $0x178] sm:$0xff]
        %v559 = vld [vmem:[%s4] sm:$0x1]
        %v561 = vlaneseq
        %v562 = vshrl.u32 %v561, 7
        %v563 = vsub.s32 0, %v562
        %v564 = vrot.slane %v559, %v563
        %566 = vmatprep.subr.mxu0 0.0
        %567 = vmatpush1.msra.mxu0 %v526
        %568 = vmatprep.subr.mxu0 0.0
        %569 = vmatpush1.msra.mxu0 %v525
        %570 = vmatprep.subr.mxu0 0.0
        %571 = vmatpush1.msra.mxu0 %v524
        %572 = vmatprep.subr.mxu0 0.0
        %573 = vmatpush1.msra.mxu0 %v523
        %574 = vmatprep.subr.mxu0 0.0
        %575 = vmatpush1.msra.mxu0 %v522
        %576 = vmatprep.subr.mxu0 0.0
        %577 = vmatpush1.msra.mxu0 %v521
        %578 = vmatprep.subr.mxu0 0.0
        %579 = vmatpush1.msra.mxu0 %v520
        %580 = vmatprep.subr.mxu0 0.0
        %581 = vmatpush1.msra.mxu0 %v519
        %582 = vmatprep.subr.mxu0 0.0
        %583 = vmatpush1.msra.mxu0 %v518
        %584 = vmatprep.subr.mxu0 0.0
        %585 = vmatpush1.msra.mxu0 %v517
        %586 = vmatprep.subr.mxu0 0.0
        %587 = vmatpush1.msra.mxu0 %v516
        %588 = vmatprep.subr.mxu0 0.0
        %589 = vmatpush1.msra.mxu0 %v515
        %590 = vmatprep.subr.mxu0 0.0
        %591 = vmatpush1.msra.mxu0 %v514
        %592 = vmatprep.subr.mxu0 0.0
        %593 = vmatpush1.msra.mxu0 %v513
        %594 = vmatprep.subr.mxu0 0.0
        %595 = vmatpush1.msra.mxu0 %v512
        %596 = vmatprep.subr.mxu0 0.0
        %597 = vmatpush1.msra.mxu0 %v511
        %598 = vmatprep.subr.mxu0 0.0
        %599 = vmatpush2.msra.mxu0 %v542
        %600 = vmatprep.subr.mxu0 0.0
        %601 = vmatpush2.msra.mxu0 %v541
        %602 = vmatprep.subr.mxu0 0.0
        %603 = vmatpush2.msra.mxu0 %v540
        %604 = vmatprep.subr.mxu0 0.0
        %605 = vmatpush2.msra.mxu0 %v539
        %606 = vmatprep.subr.mxu0 0.0
        %607 = vmatpush2.msra.mxu0 %v538
        %608 = vmatprep.subr.mxu0 0.0
        %609 = vmatpush2.msra.mxu0 %v537
        %610 = vmatprep.subr.mxu0 0.0
        %611 = vmatpush2.msra.mxu0 %v536
        %612 = vmatprep.subr.mxu0 0.0
        %613 = vmatpush2.msra.mxu0 %v535
        %614 = vmatprep.subr.mxu0 0.0
        %615 = vmatpush2.msra.mxu0 %v534
        %616 = vmatprep.subr.mxu0 0.0
        %617 = vmatpush2.msra.mxu0 %v533
        %618 = vmatprep.subr.mxu0 0.0
        %619 = vmatpush2.msra.mxu0 %v532
        %620 = vmatprep.subr.mxu0 0.0
        %621 = vmatpush2.msra.mxu0 %v531
        %622 = vmatprep.subr.mxu0 0.0
        %623 = vmatpush2.msra.mxu0 %v530
        %624 = vmatprep.subr.mxu0 0.0
        %625 = vmatpush2.msra.mxu0 %v529
        %626 = vmatprep.subr.mxu0 0.0
        %627 = vmatpush2.msra.mxu0 %v528
        %628 = vmatprep.subr.mxu0 0.0
        %629 = vmatpush2.msra.mxu0 %v527
        %630 = vmatprep.mubr.f32.mxu0 %v508
        %631 = vmatmul.mubr.f32.gmra.mxu0 %v506
        %v632 = vpop.f32.mrf.mxu0
        %v633 = vadd.f32 %v564, %v632
        %v634 = vpop.f32.mrf.mxu0
        %635 = vdwg.mxu0
        %636 = vmatprep.subr.mxu0 0.0
        %637 = vmatpush1.msra.mxu0 %v558
        %638 = vmatprep.subr.mxu0 0.0
        %639 = vmatpush1.msra.mxu0 %v557
        %640 = vmatprep.subr.mxu0 0.0
        %641 = vmatpush1.msra.mxu0 %v556
        %642 = vmatprep.subr.mxu0 0.0
        %643 = vmatpush1.msra.mxu0 %v555
        %644 = vmatprep.subr.mxu0 0.0
        %645 = vmatpush1.msra.mxu0 %v554
        %646 = vmatprep.subr.mxu0 0.0
        %647 = vmatpush1.msra.mxu0 %v553
        %648 = vmatprep.subr.mxu0 0.0
        %649 = vmatpush1.msra.mxu0 %v552
        %650 = vmatprep.subr.mxu0 0.0
        %651 = vmatpush1.msra.mxu0 %v551
        %652 = vmatprep.subr.mxu0 0.0
        %653 = vmatpush1.msra.mxu0 %v550
        %654 = vmatprep.subr.mxu0 0.0
        %655 = vmatpush1.msra.mxu0 %v549
        %656 = vmatprep.subr.mxu0 0.0
        %657 = vmatpush1.msra.mxu0 %v548
        %658 = vmatprep.subr.mxu0 0.0
        %659 = vmatpush1.msra.mxu0 %v547
        %660 = vmatprep.subr.mxu0 0.0
        %661 = vmatpush1.msra.mxu0 %v546
        %662 = vmatprep.subr.mxu0 0.0
        %663 = vmatpush1.msra.mxu0 %v545
        %664 = vmatprep.subr.mxu0 0.0
        %665 = vmatpush1.msra.mxu0 %v544
        %666 = vmatprep.subr.mxu0 0.0
        %667 = vmatpush1.msra.mxu0 %v543
        %668 = vmatprep.subr.mxu0 0.0
        %669 = vmatpush2.msra.mxu0 0.0
        %670 = vmatprep.subr.mxu0 0.0
        %671 = vmatpush2.msra.mxu0 0.0
        %672 = vmatprep.subr.mxu0 0.0
        %673 = vmatpush2.msra.mxu0 0.0
        %674 = vmatprep.subr.mxu0 0.0
        %675 = vmatpush2.msra.mxu0 0.0
        %676 = vmatprep.subr.mxu0 0.0
        %677 = vmatpush2.msra.mxu0 0.0
        %678 = vmatprep.subr.mxu0 0.0
        %679 = vmatpush2.msra.mxu0 0.0
        %680 = vmatprep.subr.mxu0 0.0
        %681 = vmatpush2.msra.mxu0 0.0
        %682 = vmatprep.subr.mxu0 0.0
        %683 = vmatpush2.msra.mxu0 0.0
        %684 = vmatprep.subr.mxu0 0.0
        %685 = vmatpush2.msra.mxu0 0.0
        %686 = vmatprep.subr.mxu0 0.0
        %687 = vmatpush2.msra.mxu0 0.0
        %688 = vmatprep.subr.mxu0 0.0
        %689 = vmatpush2.msra.mxu0 0.0
        %690 = vmatprep.subr.mxu0 0.0
        %691 = vmatpush2.msra.mxu0 0.0
        %692 = vmatprep.subr.mxu0 0.0
        %693 = vmatpush2.msra.mxu0 0.0
        %694 = vmatprep.subr.mxu0 0.0
        %695 = vmatpush2.msra.mxu0 0.0
        %696 = vmatprep.subr.mxu0 0.0
        %697 = vmatpush2.msra.mxu0 0.0
        %698 = vmatprep.subr.mxu0 0.0
        %699 = vmatpush2.msra.mxu0 0.0
        %700 = vmatprep.mubr.f32.mxu0 0.0
        %701 = vmatmul.mubr.f32.gmra.mxu0 %v510
        %v702 = vpop.f32.mrf.mxu0
        %v703 = vadd.f32 %v633, %v702
        %v704 = vpop.f32.mrf.mxu0
        %705 = vdwg.mxu0
        %706 = vxpose.xlu0.b32.start [1/16] %v703, 128
        %707 = vxpose.xlu0.b32.cont [2/16] 0.0, 128
        %708 = vxpose.xlu0.b32.cont [3/16] 0.0, 128
        %709 = vxpose.xlu0.b32.cont [4/16] 0.0, 128
        %710 = vxpose.xlu0.b32.cont [5/16] 0.0, 128
        %711 = vxpose.xlu0.b32.cont [6/16] 0.0, 128
        %712 = vxpose.xlu0.b32.cont [7/16] 0.0, 128
        %713 = vxpose.xlu0.b32.cont [8/16] 0.0, 128
        %714 = vxpose.xlu0.b32.cont [9/16] 0.0, 128
        %715 = vxpose.xlu0.b32.cont [10/16] 0.0, 128
        %716 = vxpose.xlu0.b32.cont [11/16] 0.0, 128
        %717 = vxpose.xlu0.b32.cont [12/16] 0.0, 128
        %718 = vxpose.xlu0.b32.cont [13/16] 0.0, 128
        %719 = vxpose.xlu0.b32.cont [14/16] 0.0, 128
        %720 = vxpose.xlu0.b32.cont [15/16] 0.0, 128
        %721 = vxpose.xlu0.b32.end [16/16] 0.0, 128
        %v722 = vpop.trf.xlu0
        %v723 = vpop.trf.xlu0
        %v724 = vpop.trf.xlu0
        %v725 = vpop.trf.xlu0
        %v726 = vpop.trf.xlu0
        %v727 = vpop.trf.xlu0
        %v728 = vpop.trf.xlu0
        %v729 = vpop.trf.xlu0
        %v730 = vpop.trf.xlu0
        %v731 = vpop.trf.xlu0
        %v732 = vpop.trf.xlu0
        %v733 = vpop.trf.xlu0
        %v734 = vpop.trf.xlu0
        %v735 = vpop.trf.xlu0
        %v736 = vpop.trf.xlu0
        %v737 = vpop.trf.xlu0
        %vm738 = vcmask 23552
        %739 = vst.msk [vmem:[%s254] sm:$0xff] %vm738, %v722
        %740 = vst.msk [vmem:[%s254 + $0x8] sm:$0xff] %vm738, %v723
        %741 = vst.msk [vmem:[%s254 + $0x10] sm:$0xff] %vm738, %v724
        %742 = vst.msk [vmem:[%s254 + $0x18] sm:$0xff] %vm738, %v725
        %743 = vst.msk [vmem:[%s254 + $0x20] sm:$0xff] %vm738, %v726
        %744 = vst.msk [vmem:[%s254 + $0x28] sm:$0xff] %vm738, %v727
        %745 = vst.msk [vmem:[%s254 + $0x30] sm:$0xff] %vm738, %v728
        %746 = vst.msk [vmem:[%s254 + $0x38] sm:$0xff] %vm738, %v729
        %747 = vst.msk [vmem:[%s254 + $0x40] sm:$0xff] %vm738, %v730
        %748 = vst.msk [vmem:[%s254 + $0x48] sm:$0xff] %vm738, %v731
        %749 = vst.msk [vmem:[%s254 + $0x50] sm:$0xff] %vm738, %v732
        %750 = vst.msk [vmem:[%s254 + $0x58] sm:$0xff] %vm738, %v733
        %751 = vst.msk [vmem:[%s254 + $0x60] sm:$0xff] %vm738, %v734
        %752 = vst.msk [vmem:[%s254 + $0x68] sm:$0xff] %vm738, %v735
        %753 = vst.msk [vmem:[%s254 + $0x70] sm:$0xff] %vm738, %v736
        %754 = vst.msk [vmem:[%s254 + $0x78] sm:$0xff] %vm738, %v737
        %p755 = scmp.lt.s32.totalorder %s18, 1
        %s756 = scalar_select %p755, %s18, 1
        %s757 = smul.addr %s756, 16
        %s758 = smul.addr %s757, 8
        %s759 = scalar_lea.vmem %s5, %s758
        // Predicated region
        $region49: #{tpu_custom_call.1} parent=39 // pred_check
          %p760 = pneg %p146
        $region50: #{tpu_custom_call.1} parent=39 // pred_check_branch
          %762 = sbr.rel (%p760) target = $region52
        $region51: #{tpu_custom_call.1} parent=39 // pred_region
          _
        $region52: #{tpu_custom_call.1} parent=39 // pred_fallthru
          _
      $region40: #{tpu_custom_call.1} parent=5 // pred_fallthru
        _
      %p763 = scmp.le.s32.totalorder 2, %s13
      // Predicated region
      $region53: #{tpu_custom_call.1} parent=5 // pred_check
        %p764 = pneg %p763
      $region54: #{tpu_custom_call.1} parent=5 // pred_check_branch
        %766 = sbr.rel (%p764) target = $region56
      $region55: #{tpu_custom_call.1} parent=5 // pred_region
        %s767 = ssub.s32 %s13, 2
        // Predicated region
        $region57: #{tpu_custom_call.1} parent=55 // pred_check
          %p768 = pneg %p152
        $region58: #{tpu_custom_call.1} parent=55 // pred_check_branch
          %770 = sbr.rel (%p768) target = $region60
        $region59: #{tpu_custom_call.1} parent=55 // pred_region
          %p771 = scmp.lt.s32.totalorder %s19, 1
          %s772 = scalar_select %p771, %s19, 1
          %s773 = smul.addr %s772, 16
          %s774 = smul.addr %s773, 8
          %s775 = scalar_lea.vmem %s5, %s774
        $region60: #{tpu_custom_call.1} parent=55 // pred_fallthru
          _
      $region56: #{tpu_custom_call.1} parent=5 // pred_fallthru
        _
    $region6: #{tpu_custom_call.1} parent=1 // loop_footer
      %s17 = sadd.s32 1, %s13
    $region7: #{tpu_custom_call.1} parent=1 // loop_footer_branch
      %12 = sbr.rel target = $region3
    $region8: #{tpu_custom_call.1} parent=1 // loop_exit
      _
    %776 = vsyncpa [#allocation5], 1
    %s777 = scalar_lea.sflag [#allocation5], 1
    %778 = vsyncpa %s777, 1
    %779 = vsyncpa [#allocation7], 1

</llo_original>
